<compile_context>
chip_gen: v7x
topology: tpu7x:2x2x1
jax: 0.10.0
libtpu: 0.0.40
codegen_flags: <defaults>
</compile_context>

<pallas_src>
import functools
import math

import jax
import jax.numpy as jnp
from jax.experimental import pallas as pl
from jax.experimental.pallas import tpu as pltpu


# ----------------------------------------------------------------------------
# Generation-aware tuning
# ----------------------------------------------------------------------------
@functools.lru_cache(maxsize=None)
def _tpu_tuning():
    """Return (target_input_tile_bytes, vmem_limit_bytes) for the local TPU.

    * v7x-class (64 MiB VMEM/TC, ~3.2 TB/s HBM): big tiles (the ~0.35 us/step
      pipeline overhead is ~20% of a 2 MiB step at that bandwidth), but leave
      headroom under the small physical VMEM.
    * v6e-class (128 MiB VMEM, ~1.4 TB/s): ~5 MiB tiles, raise the 32 MiB
      scoped default to 64 MiB.
    * v5e (128 MiB VMEM, ~0.82 TB/s): 2 MiB tiles are already ~93% of the HBM
      roofline; just raise the 16 MiB scoped default so nothing spills.
    """
    phys = 128 << 20
    try:
        phys = int(getattr(pltpu.get_tpu_info(), "vmem_capacity_bytes", phys))
    except Exception:
        pass
    kind = ""
    try:
        kind = jax.devices()[0].device_kind.lower()
    except Exception:
        pass
    if phys <= (64 << 20):
        # v7x-class (or any small-VMEM part).
        return min(6 << 20, phys // 8), min(44 << 20, (phys * 3) // 4)
    if "v5e" in kind or "v5 lite" in kind or "v5lite" in kind:
        return 2 << 20, 32 << 20
    # v6e-class / unknown 128 MiB part (also fine for v5p).
    return 5 << 20, 64 << 20


def _pick_tile(extent, hbm_bpu, vmem_bpu, align, target_bytes, vmem_budget,
               min_steps=4):
    """Largest multiple of `align` (<= extent) such that tile*hbm_bpu <=
    target_bytes and tile*vmem_bpu <= vmem_budget.  Tensors much larger than
    one tile keep >= min_steps grid steps (pipeline overlap + both TCs on
    v7x via dimension_semantics=('parallel', ...))."""
    extent = int(extent)
    if extent <= align:
        return extent
    t = min(target_bytes // hbm_bpu, max(vmem_budget, align * vmem_bpu) // vmem_bpu)
    t = max(align, (int(t) // align) * align)
    t = min(t, (extent // align) * align)
    if extent * hbm_bpu > target_bytes and -(-extent // t) < min_steps:
        t = max(align, ((-(-extent // min_steps)) // align) * align)
    return int(t)


# ----------------------------------------------------------------------------
# Kernels
# ----------------------------------------------------------------------------
def _ln_rows_kernel(x_ref, w_ref, b_ref, o_ref, *, eps, inv_c):
    """Simple row LayerNorm: x_ref (TR, C), normalize over last axis.

    NOTE: rows are fully independent and the ragged last grid block computes on
    uninitialized VMEM rows whose stores are masked -- do NOT add cross-row
    reductions or NaN-checking here without guarding that invariant."""
    x = x_ref[...].astype(jnp.float32)
    mean = jnp.sum(x, axis=-1, keepdims=True) * inv_c
    xc = x - mean
    var = jnp.sum(xc * xc, axis=-1, keepdims=True) * inv_c   # biased (torch parity)
    inv = jax.lax.rsqrt(var + eps)                            # EUP
    w = w_ref[...].astype(jnp.float32)
    b = b_ref[...].astype(jnp.float32)
    o_ref[...] = (xc * (inv * w) + b).astype(o_ref.dtype)


def _ln_packed_kernel(x_ref, w_ref, b_ref, seg_ref, o_ref, *, eps, inv_c):
    """Lane-packed LayerNorm: x_ref (TR, PC) holds P logical rows of C channels
    per physical row (PC = lcm(C, 128), lane-dense).  seg_ref is a (PC, PC)
    block-diagonal ones matrix; x @ seg gives each lane its per-logical-row sum
    already broadcast, on the otherwise-idle MXU (kernel stays HBM-bound and
    stores are unmasked full-lane vst).

    Precision note: default-precision f32 dot -- Mosaic's f32 matmul lowering
    is multi-pass and the self-test below validates ~1e-5 abs error.  Passing
    Precision.HIGHEST would roughly double MXU work and can make the seg-reduce
    the binding unit on v5e at PC=384; only do that if stricter torch parity is
    ever required."""
    x = x_ref[...].astype(jnp.float32)
    seg = seg_ref[...]
    s1 = jnp.dot(x, seg, preferred_element_type=jnp.float32)      # MXU segmented sum
    mean = s1 * inv_c
    xc = x - mean
    s2 = jnp.dot(xc * xc, seg, preferred_element_type=jnp.float32)
    inv = jax.lax.rsqrt(s2 * inv_c + eps)
    w = w_ref[...].astype(jnp.float32)   # (1, PC) = weight tiled P times
    b = b_ref[...].astype(jnp.float32)
    o_ref[...] = (xc * (inv * w) + b).astype(o_ref.dtype)


def _ln_cf_kernel(x_ref, w_ref, b_ref, o_ref, *, eps, inv_c):
    """Channels-first LayerNorm: x_ref (C, TL); reduce over channel (sublane) axis."""
    x = x_ref[...].astype(jnp.float32)                        # (C, TL)
    mean = jnp.sum(x, axis=0, keepdims=True) * inv_c          # (1, TL) XLU sublane reduce
    xc = x - mean
    var = jnp.sum(xc * xc, axis=0, keepdims=True) * inv_c
    inv = jax.lax.rsqrt(var + eps)                            # (1, TL)
    w = w_ref[...].astype(jnp.float32)                        # (C, 1)
    b = b_ref[...].astype(jnp.float32)
    o_ref[...] = (xc * (inv * w) + b).astype(o_ref.dtype)


# ----------------------------------------------------------------------------
# Wrappers
# ----------------------------------------------------------------------------
def _ln_rows_simple(x2d, weight, bias, eps):
    R, C = x2d.shape
    isz = jnp.dtype(x2d.dtype).itemsize
    target, vmem_limit = _tpu_tuning()
    # VMEM per row: double-buffered in + out blocks plus ~3 f32 intermediates
    # (x.astype(f32), xc, products) that Mosaic materializes internally.
    vmem_bpu = C * (4 * isz + 3 * 4)
    TR = _pick_tile(R, C * isz, vmem_bpu, 8, target, int(vmem_limit * 0.8))
    grid = (pl.cdiv(R, TR),)
    w2 = weight.astype(jnp.float32).reshape(1, C)
    b2 = bias.astype(jnp.float32).reshape(1, C)
    return pl.pallas_call(
        functools.partial(_ln_rows_kernel, eps=eps, inv_c=1.0 / C),
        out_shape=jax.ShapeDtypeStruct((R, C), x2d.dtype),
        grid_spec=pltpu.PrefetchScalarGridSpec(
            num_scalar_prefetch=0,
            grid=grid,
            in_specs=[
                pl.BlockSpec((TR, C), lambda i: (i, 0)),
                pl.BlockSpec((1, C), lambda i: (0, 0)),
                pl.BlockSpec((1, C), lambda i: (0, 0)),
            ],
            out_specs=pl.BlockSpec((TR, C), lambda i: (i, 0)),
        ),
        compiler_params=pltpu.CompilerParams(
            dimension_semantics=("parallel",),
            vmem_limit_bytes=vmem_limit),
    )(x2d, w2, b2)


def _ln_rows_packed(x2d, weight, bias, eps, P):
    R, C = x2d.shape
    PC = P * C                                   # lcm(C, 128): lane-dense
    Rp = R // P
    xp = x2d.reshape(Rp, PC)                     # contiguous reshape (free)

    # Constants.  Their block indices are constant across the grid, so Pallas
    # DMAs them into VMEM once per core (not per step); under jit their
    # construction constant-folds in the wrapper.
    wq = jnp.tile(weight.astype(jnp.float32), P).reshape(1, PC)
    bq = jnp.tile(bias.astype(jnp.float32), P).reshape(1, PC)
    gid = jnp.arange(PC, dtype=jnp.int32) // C
    seg = (gid[:, None] == gid[None, :]).astype(jnp.float32)   # (PC, PC) block-diag

    isz = jnp.dtype(x2d.dtype).itemsize
    target, vmem_limit = _tpu_tuning()
    vmem_budget = int(vmem_limit * 0.8) - 2 * PC * PC * 4 - 4 * 2 * PC * 4
    vmem_bpu = PC * (4 * isz + 3 * 4)
    TR = _pick_tile(Rp, PC * isz, vmem_bpu, 8, target, vmem_budget)
    grid = (pl.cdiv(Rp, TR),)

    out = pl.pallas_call(
        functools.partial(_ln_packed_kernel, eps=eps, inv_c=1.0 / C),
        out_shape=jax.ShapeDtypeStruct((Rp, PC), x2d.dtype),
        grid_spec=pltpu.PrefetchScalarGridSpec(
            num_scalar_prefetch=0,
            grid=grid,
            in_specs=[
                pl.BlockSpec((TR, PC), lambda i: (i, 0)),
                pl.BlockSpec((1, PC), lambda i: (0, 0)),
                pl.BlockSpec((1, PC), lambda i: (0, 0)),
                pl.BlockSpec((PC, PC), lambda i: (0, 0)),
            ],
            out_specs=pl.BlockSpec((TR, PC), lambda i: (i, 0)),
        ),
        compiler_params=pltpu.CompilerParams(
            dimension_semantics=("parallel",),
            vmem_limit_bytes=vmem_limit),
    )(xp, wq, bq, seg)
    return out.reshape(R, C)


def _layernorm_channels_last(x2d, weight, bias, eps):
    R, C = x2d.shape
    if C % 128 == 0:
        # Already lane-dense: plain row kernel stores full 128-lane vst.
        return _ln_rows_simple(x2d, weight, bias, eps)
    PC = (C * 128) // math.gcd(C, 128)           # lcm(C, 128)
    P = PC // C
    if PC > 512 or R < P:
        # Pack factor too wide (seg matmul would stop being free) or too few rows.
        return _ln_rows_simple(x2d, weight, bias, eps)
    R_main = (R // P) * P
    if R_main == R:
        return _ln_rows_packed(x2d, weight, bias, eps, P)
    # Ragged row count: keep the bulk on the lane-dense packed path; only the
    # < P leftover rows take the narrow masked-store fallback.  (The slice +
    # concat cost roughly one extra HBM pass and are only hit when
    # B*H*W % P != 0, which is rare for ConvNeXt-style shapes.)
    y_main = _ln_rows_packed(x2d[:R_main], weight, bias, eps, P)
    y_rem = _ln_rows_simple(x2d[R_main:], weight, bias, eps)
    return jnp.concatenate([y_main, y_rem], axis=0)


def _layernorm_channels_first(x, weight, bias, eps):
    """x: (B, C, H, W). Normalizes over C with no transposes: view as (B, C, H*W)
    and tile the spatial axis (lanes); reduce over C (sublanes)."""
    B, C, H, W = x.shape
    L = H * W
    x3 = x.reshape(B, C, L)                      # contiguous reshape (free)
    wc = weight.astype(jnp.float32).reshape(C, 1)
    bc = bias.astype(jnp.float32).reshape(C, 1)

    isz = jnp.dtype(x.dtype).itemsize
    target, vmem_limit = _tpu_tuning()
    vmem_bpu = C * (4 * isz + 3 * 4)
    TL = _pick_tile(L, C * isz, vmem_bpu, 128, target, int(vmem_limit * 0.8))
    grid = (B, pl.cdiv(L, TL))

    out = pl.pallas_call(
        functools.partial(_ln_cf_kernel, eps=eps, inv_c=1.0 / C),
        out_shape=jax.ShapeDtypeStruct((B, C, L), x.dtype),
        grid_spec=pltpu.PrefetchScalarGridSpec(
            num_scalar_prefetch=0,
            grid=grid,
            in_specs=[
                pl.BlockSpec((pl.Squeezed(), C, TL), lambda b, l: (b, 0, l)),
                pl.BlockSpec((C, 1), lambda b, l: (0, 0)),
                pl.BlockSpec((C, 1), lambda b, l: (0, 0)),
            ],
            out_specs=pl.BlockSpec((pl.Squeezed(), C, TL), lambda b, l: (b, 0, l)),
        ),
        compiler_params=pltpu.CompilerParams(
            dimension_semantics=("parallel", "parallel"),
            vmem_limit_bytes=vmem_limit),
    )(x3, wc, bc)
    return out.reshape(B, C, H, W)


class LayerNorm:
    """JAX/Pallas port of the PyTorch LayerNorm module (both data formats)."""

    def __init__(self, normalized_shape, eps=1e-6, data_format="channels_last"):
        if data_format not in ["channels_last", "channels_first"]:
            raise NotImplementedError
        self.weight = jnp.ones((normalized_shape,), dtype=jnp.float32)
        self.bias = jnp.zeros((normalized_shape,), dtype=jnp.float32)
        self.eps = eps
        self.data_format = data_format
        self.normalized_shape = (normalized_shape,)

    def __call__(self, x):
        C = self.normalized_shape[0]
        if self.data_format == "channels_last":
            orig_shape = x.shape
            assert orig_shape[-1] == C
            x2d = x.reshape(-1, C)
            y = _layernorm_channels_last(x2d, self.weight, self.bias, self.eps)
            return y.reshape(orig_shape)
        else:  # channels_first: (B, C, H, W), normalize over axis 1
            assert x.ndim == 4 and x.shape[1] == C
            return _layernorm_channels_first(x, self.weight, self.bias, self.eps)


# ----------------------------------------------------------------------------
# References + test
# ----------------------------------------------------------------------------
def _ref_channels_first(x, w, b, eps):
    u = jnp.mean(x, axis=1, keepdims=True)
    s = jnp.mean((x - u) ** 2, axis=1, keepdims=True)
    xn = (x - u) / jnp.sqrt(s + eps)
    return w[:, None, None] * xn + b[:, None, None]


def _ref_channels_last(x, w, b, eps):
    u = jnp.mean(x, axis=-1, keepdims=True)
    s = jnp.mean((x - u) ** 2, axis=-1, keepdims=True)
    return (x - u) / jnp.sqrt(s + eps) * w + b


if __name__ == "__main__":
    key = jax.random.PRNGKey(0)
    k1, k2, k3, k4, k5 = jax.random.split(key, 5)

    C = 32
    scale = 1.0 + 0.01 * jnp.arange(C, dtype=jnp.float32)
    shift = 0.1 * jnp.arange(C, dtype=jnp.float32)

    # channels_first: (B, C, H, W) -- exercises the transpose-free CF kernel.
    x_cf = jax.random.normal(k1, (2, C, 16, 16), dtype=jnp.float32)
    ln_cf = LayerNorm(C, eps=1e-6, data_format="channels_first")
    ln_cf.weight, ln_cf.bias = scale, shift
    y_cf = jax.block_until_ready(ln_cf(x_cf))
    ref_cf = _ref_channels_first(x_cf, scale, shift, 1e-6)
    assert y_cf.shape == x_cf.shape
    assert jnp.allclose(y_cf, ref_cf, atol=1e-4, rtol=1e-4)

    # channels_last: (B, H, W, C) -- exercises the lane-packed (MXU reduce) kernel.
    x_cl = jax.random.normal(k2, (2, 8, 8, C), dtype=jnp.float32)
    ln_cl = LayerNorm(C, eps=1e-6, data_format="channels_last")
    ln_cl.weight, ln_cl.bias = scale, shift
    y_cl = jax.block_until_ready(ln_cl(x_cl))
    ref_cl = _ref_channels_last(x_cl, scale, shift, 1e-6)
    assert y_cl.shape == x_cl.shape
    assert jnp.allclose(y_cl, ref_cl, atol=1e-4, rtol=1e-4)

    # channels_last with a row count not divisible by the pack factor: the bulk
    # still takes the packed path, remainder rows take the simple kernel.
    x_rg = jax.random.normal(k3, (1, 3, 5, C), dtype=jnp.float32)
    y_rg = jax.block_until_ready(ln_cl(x_rg))
    ref_rg = _ref_channels_last(x_rg, scale, shift, 1e-6)
    assert y_rg.shape == x_rg.shape
    assert jnp.allclose(y_rg, ref_rg, atol=1e-4, rtol=1e-4)

    # channels_last with ConvNeXt-style C=96 (not a divisor of 128):
    # exercises the generalized lcm(C, 128) = 384 lane-packed path.
    C96 = 96
    scale96 = 1.0 + 0.01 * jnp.arange(C96, dtype=jnp.float32)
    shift96 = 0.1 * jnp.arange(C96, dtype=jnp.float32)
    x96 = jax.random.normal(k4, (1, 4, 4, C96), dtype=jnp.float32)
    ln96 = LayerNorm(C96, eps=1e-6, data_format="channels_last")
    ln96.weight, ln96.bias = scale96, shift96
    y96 = jax.block_until_ready(ln96(x96))
    ref96 = _ref_channels_last(x96, scale96, shift96, 1e-6)
    assert y96.shape == x96.shape
    assert jnp.allclose(y96, ref96, atol=5e-4, rtol=5e-4)

    # bf16 input: exercises the dtype-aware tile sizing; tolerance bounded by
    # the final bf16 rounding of the output.
    x_bf = jax.random.normal(k5, (2, 8, 8, C), dtype=jnp.float32).astype(jnp.bfloat16)
    y_bf = jax.block_until_ready(ln_cl(x_bf))
    ref_bf = _ref_channels_last(x_bf.astype(jnp.float32), scale, shift, 1e-6)
    assert y_bf.shape == x_bf.shape
    assert jnp.allclose(y_bf.astype(jnp.float32), ref_bf, atol=6e-2, rtol=6e-2)

    print("KERNEL_OK")
</pallas_src>

<mosaic_0001>
module attributes {stable_mosaic.version = 11 : i64} {
  func.func @_ln_cf_kernel(%arg0: i32, %arg1: i32, %arg2: memref<1x32x256xf32, #tpu.memory_space<vmem>>, %arg3: memref<32x1xf32, #tpu.memory_space<vmem>>, %arg4: memref<32x1xf32, #tpu.memory_space<vmem>>, %arg5: memref<1x32x256xf32, #tpu.memory_space<vmem>>) attributes {dimension_semantics = [#tpu.dimension_semantics<parallel>, #tpu.dimension_semantics<parallel>], iteration_bounds = array<i64: 2, 1>, scalar_prefetch = 0 : i64, scratch_operands = 0 : i64, tpu.core_type = #tpu.core_type<tc>, window_params = [{transform_indices = @transform_0, window_bounds = array<i64: 1, 32, 256>}, {pipeline_mode = #tpu.pipeline_mode<synchronous>, transform_indices = @transform_1, window_bounds = array<i64: 32, 1>}, {pipeline_mode = #tpu.pipeline_mode<synchronous>, transform_indices = @transform_2, window_bounds = array<i64: 32, 1>}, {transform_indices = @transform_3, window_bounds = array<i64: 1, 32, 256>}]} {
    %c0 = arith.constant 0 : index
    %c0_0 = arith.constant 0 : index
    %c0_1 = arith.constant 0 : index
    %0 = vector.load %arg2[%c0, %c0_0, %c0_1] : memref<1x32x256xf32, #tpu.memory_space<vmem>>, vector<1x32x256xf32>
    %1 = vector.shape_cast %0 : vector<1x32x256xf32> to vector<32x256xf32>
    %cst = arith.constant dense<0.000000e+00> : vector<256xf32>
    %2 = vector.multi_reduction <add>, %1, %cst [0] : vector<32x256xf32> to vector<256xf32>
    %3 = vector.shape_cast %2 : vector<256xf32> to vector<1x256xf32>
    %cst_2 = arith.constant 3.125000e-02 : f32
    %4 = vector.broadcast %cst_2 : f32 to vector<1x256xf32>
    %5 = arith.mulf %3, %4 : vector<1x256xf32>
    %6 = vector.broadcast %5 : vector<1x256xf32> to vector<32x256xf32>
    %7 = arith.subf %1, %6 : vector<32x256xf32>
    %8 = arith.mulf %7, %7 : vector<32x256xf32>
    %cst_3 = arith.constant dense<0.000000e+00> : vector<256xf32>
    %9 = vector.multi_reduction <add>, %8, %cst_3 [0] : vector<32x256xf32> to vector<256xf32>
    %10 = vector.shape_cast %9 : vector<256xf32> to vector<1x256xf32>
    %cst_4 = arith.constant 3.125000e-02 : f32
    %11 = vector.broadcast %cst_4 : f32 to vector<1x256xf32>
    %12 = arith.mulf %10, %11 : vector<1x256xf32>
    %cst_5 = arith.constant 9.99999997E-7 : f32
    %13 = vector.broadcast %cst_5 : f32 to vector<1x256xf32>
    %14 = arith.addf %12, %13 : vector<1x256xf32>
    %15 = math.rsqrt %14 : vector<1x256xf32>
    %c0_6 = arith.constant 0 : index
    %c0_7 = arith.constant 0 : index
    %16 = vector.load %arg3[%c0_6, %c0_7] : memref<32x1xf32, #tpu.memory_space<vmem>>, vector<32x1xf32>
    %c0_8 = arith.constant 0 : index
    %c0_9 = arith.constant 0 : index
    %17 = vector.load %arg4[%c0_8, %c0_9] : memref<32x1xf32, #tpu.memory_space<vmem>>, vector<32x1xf32>
    %18 = vector.broadcast %15 : vector<1x256xf32> to vector<32x256xf32>
    %19 = vector.broadcast %16 : vector<32x1xf32> to vector<32x256xf32>
    %20 = arith.mulf %18, %19 : vector<32x256xf32>
    %21 = arith.mulf %7, %20 : vector<32x256xf32>
    %22 = vector.broadcast %17 : vector<32x1xf32> to vector<32x256xf32>
    %23 = arith.addf %21, %22 : vector<32x256xf32>
    %c0_10 = arith.constant 0 : index
    %c0_11 = arith.constant 0 : index
    %c0_12 = arith.constant 0 : index
    %24 = vector.load %arg5[%c0_10, %c0_11, %c0_12] : memref<1x32x256xf32, #tpu.memory_space<vmem>>, vector<1x32x256xf32>
    %25 = vector.shape_cast %24 : vector<1x32x256xf32> to vector<32x256xf32>
    %26 = vector.shape_cast %23 : vector<32x256xf32> to vector<1x32x256xf32>
    tpu.vector_store %arg5[%c0_10, %c0_11, %c0_12], %26 {strides = array<i32>} : memref<1x32x256xf32, #tpu.memory_space<vmem>>, vector<1x32x256xf32>,
    return
  }
  func.func @transform_0(%arg0: i32, %arg1: i32) -> (i32, i32, i32) {
    %c0_i32 = arith.constant 0 : i32
    %c0_i32_0 = arith.constant 0 : i32
    return %arg0, %c0_i32, %arg1 : i32, i32, i32
  }
  func.func @transform_1(%arg0: i32, %arg1: i32) -> (i32, i32) {
    %c0_i32 = arith.constant 0 : i32
    %c0_i32_0 = arith.constant 0 : i32
    %c0_i32_1 = arith.constant 0 : i32
    return %c0_i32, %c0_i32_0 : i32, i32
  }
  func.func @transform_2(%arg0: i32, %arg1: i32) -> (i32, i32) {
    %c0_i32 = arith.constant 0 : i32
    %c0_i32_0 = arith.constant 0 : i32
    %c0_i32_1 = arith.constant 0 : i32
    return %c0_i32, %c0_i32_0 : i32, i32
  }
  func.func @transform_3(%arg0: i32, %arg1: i32) -> (i32, i32, i32) {
    %c0_i32 = arith.constant 0 : i32
    %c0_i32_0 = arith.constant 0 : i32
    return %arg0, %c0_i32, %arg1 : i32, i32, i32
  }
}

</mosaic_0001>

<llo_original>
// kernel: tpu_custom_call.1
$region0: #{tpu_custom_call.1}
  #allocation0 [shape = 'u32[]', space=smem, size = 0x4, offset = 0x4, fixed_abs, tag = 'smem constant byte address 0x4 - core index']
  #allocation1 [shape = 'u32[144,128]{1,0:T(1,128)}', space=vmem, size = 0x12000, scoped, tag = 'internal scratch']
  %s0 = inlined_call_operand.hbm [shape: f32[2,32,256], index: 0, kind: input, shape index: {}]
  %s1 = inlined_call_operand.hbm [shape: f32[32,1], index: 1, kind: input, shape index: {}]
  %s2 = inlined_call_operand.hbm [shape: f32[32,1], index: 2, kind: input, shape index: {}]
  %s3 = inlined_call_operand.hbm [shape: f32[2,32,256], index: 3, kind: output, shape index: {}]
  %s4 = sld [smem:[#allocation0]]
  $region57: #{tpu_custom_call.1} parent=0
    _
  %s6 = ssub.s32 1, %s4
  %s7 = scalar_select 0, %s6, %s4
  $region1: #{tpu_custom_call.1} parent=0
    #allocation2 [shape = 'u8[65536]{0}', space=vmem, size = 0x10000, scoped, tag = 'input window, operand 0']
    #allocation3 [shape = 's32[2]{0}', space=sflag, size = 0x8, scoped, tag = 'scoped memory for tpu_custom_call.1']
    #allocation4 [shape = 's32[2]{0}', space=sflag, size = 0x8, scoped, tag = 'scoped memory for tpu_custom_call.1']
    #allocation5 [shape = 'u8[16384]{0}', space=vmem, size = 0x4000, scoped, tag = 'input window, operand 1, single buffered']
    #allocation6 [shape = 's32[1]{0}', space=sflag, size = 0x4, scoped, tag = 'scoped memory for tpu_custom_call.1']
    #allocation7 [shape = 'u8[16384]{0}', space=vmem, size = 0x4000, scoped, tag = 'input window, operand 2, single buffered']
    #allocation8 [shape = 'u8[65536]{0}', space=vmem, size = 0x10000, scoped, tag = 'output window, operand 0']
    %8 = vsyncpa [#allocation3], 0
    %s9 = scalar_lea.sflag [#allocation3], 1
    %10 = vsyncpa %s9, 0
    %11 = vsyncpa [#allocation6], 0
    %12 = vsyncpa [#allocation4], 0
    %s13 = scalar_lea.sflag [#allocation4], 1
    %14 = vsyncpa %s13, 0
    loop: start=0, step=1, limit=4
    $region2: #{tpu_custom_call.1} parent=1 // loop_pre_header
      _
    $region3: #{tpu_custom_call.1} parent=1 // loop_header
      %s16 = sphi 0, %s20
      %p17 = scmp.ge.s32.totalorder %s16, 4
      %s23 = sphi 0, %s35
      %s24 = sphi 0, %s31
      %s25 = sphi 0, %s23
      %s26 = sphi 0, %s24
      %s27 = sphi 0, %s25
      %s28 = sphi 0, %s26
      %s40 = sphi 0, %s42
      %s43 = sphi 0, %s40
      %s44 = sphi 0, %s43
      %s60 = sphi 0, %s44
      %s64 = sphi 0, %s64
      %s66 = sphi 0, %s64
      %s67 = sphi 0, %s66
      %s81 = sphi 0, %s67
      %s85 = sphi 0, %s85
      %s87 = sphi 0, %s85
      %s88 = sphi 0, %s87
      %s102 = sphi 0, %s88
      %s110 = sphi 0, %s112
      %s113 = sphi 0, %s110
      %s114 = sphi 0, %s113
      %s130 = sphi 0, %s114
    $region4: #{tpu_custom_call.1} parent=1 // loop_header_branch
      %19 = sbr.rel (%p17) target = $region8
    $region5: #{tpu_custom_call.1} parent=1 // loop_body
      %s21 = ssub.s32 %s16, 1
      %s22 = ssub.s32 %s16, 2
      %s29 = sadd.s32 1, %s24
      %p30 = scmp.ge.s32.totalorder %s29, 1
      %s31 = scalar_select %p30, 0, %s29
      %s32 = sadd.s32 1, %s23
      %s33 = scalar_select %p30, %s32, %s23
      %p34 = scmp.ge.s32.totalorder %s33, 2
      %s35 = scalar_select %p34, 0, %s33
      %s36 = ssub.s32 %s23, %s35
      %s37 = ssub.s32 %s24, %s31
      %s38 = sor.u32 %s36, %s37
      %p39 = scmp.eq.s32.totalorder %s38, 0
      %s41 = sadd.s32 %s40, 1
      %s42 = scalar_select %p39, %s40, %s41
      %p45 = pneg %p39
      %p46 = scmp.eq.s32.totalorder %s16, 1
      %p47 = por %p45, %p46
      %p48 = scmp.ne.s32.totalorder %s40, %s43
      %p49 = scmp.eq.s32.totalorder %s16, 0
      %p50 = por %p48, %p49
      %p51 = scmp.ne.s32.totalorder %s40, %s43
      %p52 = scmp.eq.s32.totalorder %s21, 1
      %p53 = por %p51, %p52
      %p54 = scmp.ne.s32.totalorder %s43, %s44
      %p55 = scmp.eq.s32.totalorder %s21, 0
      %p56 = por %p54, %p55
      %p57 = scmp.ne.s32.totalorder %s43, %s44
      %p58 = scmp.eq.s32.totalorder %s22, 1
      %p59 = por %p57, %p58
      %p61 = scmp.ne.s32.totalorder %s44, %s60
      %p62 = scmp.eq.s32.totalorder %s22, 0
      %p63 = por %p61, %p62
      %s65 = sadd.s32 %s64, 1
      %p68 = scmp.eq.s32.totalorder %s16, 1
      %p69 = scmp.ne.s32.totalorder %s64, %s66
      %p70 = scmp.eq.s32.totalorder %s16, 0
      %p71 = por %p69, %p70
      %p72 = scmp.ne.s32.totalorder %s64, %s66
      %p73 = scmp.eq.s32.totalorder %s21, 1
      %p74 = por %p72, %p73
      %p75 = scmp.ne.s32.totalorder %s66, %s67
      %p76 = scmp.eq.s32.totalorder %s21, 0
      %p77 = por %p75, %p76
      %p78 = scmp.ne.s32.totalorder %s66, %s67
      %p79 = scmp.eq.s32.totalorder %s22, 1
      %p80 = por %p78, %p79
      %p82 = scmp.ne.s32.totalorder %s67, %s81
      %p83 = scmp.eq.s32.totalorder %s22, 0
      %p84 = por %p82, %p83
      %s86 = sadd.s32 %s85, 1
      %p89 = scmp.eq.s32.totalorder %s16, 1
      %p90 = scmp.ne.s32.totalorder %s85, %s87
      %p91 = scmp.eq.s32.totalorder %s16, 0
      %p92 = por %p90, %p91
      %p93 = scmp.ne.s32.totalorder %s85, %s87
      %p94 = scmp.eq.s32.totalorder %s21, 1
      %p95 = por %p93, %p94
      %p96 = scmp.ne.s32.totalorder %s87, %s88
      %p97 = scmp.eq.s32.totalorder %s21, 0
      %p98 = por %p96, %p97
      %p99 = scmp.ne.s32.totalorder %s87, %s88
      %p100 = scmp.eq.s32.totalorder %s22, 1
      %p101 = por %p99, %p100
      %p103 = scmp.ne.s32.totalorder %s88, %s102
      %p104 = scmp.eq.s32.totalorder %s22, 0
      %p105 = por %p103, %p104
      %s106 = ssub.s32 %s23, %s35
      %s107 = ssub.s32 %s24, %s31
      %s108 = sor.u32 %s106, %s107
      %p109 = scmp.eq.s32.totalorder %s108, 0
      %s111 = sadd.s32 %s110, 1
      %s112 = scalar_select %p109, %s110, %s111
      %p115 = pneg %p109
      %p116 = scmp.eq.s32.totalorder %s16, 1
      %p117 = por %p115, %p116
      %p118 = scmp.ne.s32.totalorder %s110, %s113
      %p119 = scmp.eq.s32.totalorder %s16, 0
      %p120 = por %p118, %p119
      %p121 = scmp.ne.s32.totalorder %s110, %s113
      %p122 = scmp.eq.s32.totalorder %s21, 1
      %p123 = por %p121, %p122
      %p124 = scmp.ne.s32.totalorder %s113, %s114
      %p125 = scmp.eq.s32.totalorder %s21, 0
      %p126 = por %p124, %p125
      %p127 = scmp.ne.s32.totalorder %s113, %s114
      %p128 = scmp.eq.s32.totalorder %s22, 1
      %p129 = por %p127, %p128
      %p131 = scmp.ne.s32.totalorder %s114, %s130
      %p132 = scmp.eq.s32.totalorder %s22, 0
      %p133 = por %p131, %p132
      %p134 = scmp.le.s32.totalorder 1, %s16
      %p135 = scmp.lt.s32.totalorder %s16, 3
      %p136 = pnand %p134, %p135
      %p137 = pneg %p136
      // Predicated region
      $region9: #{tpu_custom_call.1} parent=5 // pred_check
        _
      $region10: #{tpu_custom_call.1} parent=5 // pred_check_branch
        %139 = sbr.rel (%p136) target = $region12
      $region11: #{tpu_custom_call.1} parent=5 // pred_region
        %s140 = ssub.s32 %s16, 1
        // Predicated region
        $region13: #{tpu_custom_call.1} parent=11 // pred_check
          %p141 = pneg %p77
        $region14: #{tpu_custom_call.1} parent=11 // pred_check_branch
          %143 = sbr.rel (%p141) target = $region16
        $region15: #{tpu_custom_call.1} parent=11 // pred_region
          %s145 = ssub.s32 512, 512
          %146 = vsyncadd [#allocation6], %s145
          %s147 = sshll.u32 [#allocation5], 4
          %s148 = int_to_ptr.vmem [resolvable:$true] %s147
          %153 = dma.hbm_to_vmem [thread:$0]  %s1, 512, %s148, [#allocation6], 128, 128, 8
        $region16: #{tpu_custom_call.1} parent=11 // pred_fallthru
          _
        // Predicated region
        $region17: #{tpu_custom_call.1} parent=11 // pred_check
          %p154 = pneg %p98
        $region18: #{tpu_custom_call.1} parent=11 // pred_check_branch
          %156 = sbr.rel (%p154) target = $region20
        $region19: #{tpu_custom_call.1} parent=11 // pred_region
          %s158 = ssub.s32 512, 512
          %159 = vsyncadd [#allocation6], %s158
          %s160 = sshll.u32 [#allocation7], 4
          %s161 = int_to_ptr.vmem [resolvable:$true] %s160
          %166 = dma.hbm_to_vmem [thread:$0]  %s2, 512, %s161, [#allocation6], 128, 128, 8
        $region20: #{tpu_custom_call.1} parent=11 // pred_fallthru
          _
      $region12: #{tpu_custom_call.1} parent=5 // pred_fallthru
        _
      %p167 = scmp.lt.s32.totalorder %s16, 2
      // Predicated region
      $region21: #{tpu_custom_call.1} parent=5 // pred_check
        %p168 = pneg %p167
      $region22: #{tpu_custom_call.1} parent=5 // pred_check_branch
        %170 = sbr.rel (%p168) target = $region24
      $region23: #{tpu_custom_call.1} parent=5 // pred_region
        // Predicated region
        $region25: #{tpu_custom_call.1} parent=23 // pred_check
          %p171 = pneg %p50
        $region26: #{tpu_custom_call.1} parent=23 // pred_check_branch
          %173 = sbr.rel (%p171) target = $region28
        $region27: #{tpu_custom_call.1} parent=23 // pred_region
          %s174 = sand.u32 %s40, 1
          %s175 = scalar_lea.sflag [#allocation3], %s174
          %s176 = sand.u32 %s40, 1
          %s177 = smul.addr %s176, 64
          %s178 = scalar_lea.vmem [#allocation2], %s177
          %s179 = smul.u32 2, %s24
          %s181 = ssub.s32 1024, 1024
          %182 = vsyncadd %s175, %s181
          %s183 = smul.addr %s23, 8
          %s184 = sadd.s32 %s179, %s183
          %s185 = smul.addr %s184, 128
          %s186 = scalar_lea.hbm %s0, %s185
          %s187 = sshll.u32 %s178, 4
          %s188 = int_to_ptr.vmem [resolvable:$true] %s187
          %193 = dma.hbm_to_vmem [thread:$0]  %s186, 1024, %s188, %s175, 256, 256, 16
        $region28: #{tpu_custom_call.1} parent=23 // pred_fallthru
          _
      $region24: #{tpu_custom_call.1} parent=5 // pred_fallthru
        _
      %p194 = scmp.le.s32.totalorder 1, %s16
      %p195 = scmp.lt.s32.totalorder %s16, 3
      %p196 = pnand %p194, %p195
      %p197 = pneg %p196
      // Predicated region
      $region29: #{tpu_custom_call.1} parent=5 // pred_check
        _
      $region30: #{tpu_custom_call.1} parent=5 // pred_check_branch
        %199 = sbr.rel (%p196) target = $region32
      $region31: #{tpu_custom_call.1} parent=5 // pred_region
        %s200 = ssub.s32 %s16, 1
        %s201 = sand.u32 %s43, 1
        %s202 = scalar_lea.sflag [#allocation3], %s201
        %s203 = sand.u32 %s43, 1
        %s204 = smul.addr %s203, 64
        %s205 = scalar_lea.vmem [#allocation2], %s204
        // Predicated region
        $region33: #{tpu_custom_call.1} parent=31 // pred_check
          %p206 = pneg %p56
        $region34: #{tpu_custom_call.1} parent=31 // pred_check_branch
          %208 = sbr.rel (%p206) target = $region36
        $region35: #{tpu_custom_call.1} parent=31 // pred_region
          %209 = dma.done %s202, 1024
        $region36: #{tpu_custom_call.1} parent=31 // pred_fallthru
          _
        // Predicated region
        $region37: #{tpu_custom_call.1} parent=31 // pred_check
          %p210 = pneg %p77
        $region38: #{tpu_custom_call.1} parent=31 // pred_check_branch
          %212 = sbr.rel (%p210) target = $region40
        $region39: #{tpu_custom_call.1} parent=31 // pred_region
          %213 = dma.done [#allocation6], 512
        $region40: #{tpu_custom_call.1} parent=31 // pred_fallthru
          _
        // Predicated region
        $region41: #{tpu_custom_call.1} parent=31 // pred_check
          %p214 = pneg %p98
        $region42: #{tpu_custom_call.1} parent=31 // pred_check_branch
          %216 = sbr.rel (%p214) target = $region44
        $region43: #{tpu_custom_call.1} parent=31 // pred_region
          %217 = dma.done [#allocation6], 512
        $region44: #{tpu_custom_call.1} parent=31 // pred_fallthru
          _
        %s218 = sand.u32 %s43, 1
        %s219 = scalar_lea.sflag [#allocation3], %s218
        %s220 = sand.u32 %s43, 1
        %s221 = smul.addr %s220, 64
        %s222 = scalar_lea.vmem [#allocation2], %s221
        %p223 = pneg %p56
        %p224 = pneg %p53
        %p225 = pneg %p77
        %p226 = pneg %p74
        %p227 = pneg %p98
        %p228 = pneg %p95
        %p229 = pneg %p126
        %p230 = pneg %p123
        %s231 = sand.u32 %s113, 1
        %s232 = scalar_lea.sflag [#allocation4], %s231
        %s233 = sand.u32 %s113, 1
        %s234 = smul.addr %s233, 64
        %s235 = scalar_lea.vmem [#allocation8], %s234
        %s236 = smul.u32 2, %s26
        %s237 = smul.u32 2, %s26
        %v238 = vld [vmem:[%s205] sm:$0xff]
        %v239 = vld [vmem:[%s205 + $0x8] sm:$0xff]
        %v240 = vld [vmem:[%s205 + $0x10] sm:$0xff]
        %v241 = vld [vmem:[%s205 + $0x18] sm:$0xff]
        %v242 = vld [vmem:[%s205 + $0x20] sm:$0xff]
        %v243 = vld [vmem:[%s205 + $0x28] sm:$0xff]
        %v244 = vld [vmem:[%s205 + $0x30] sm:$0xff]
        %v245 = vld [vmem:[%s205 + $0x38] sm:$0xff]
        %v246 = vadd.f32 %v238, %v240
        %v247 = vadd.f32 %v246, %v242
        %v248 = vadd.f32 %v247, %v244
        %v249 = vrot.slane %v248, 4
        %v250 = vadd.f32 %v248, %v249
        %v251 = vrot.slane %v250, 2
        %v252 = vadd.f32 %v250, %v251
        %v253 = vrot.slane %v252, 1
        %v254 = vadd.f32 %v252, %v253
        %v255 = vadd.f32 %v239, %v241
        %v256 = vadd.f32 %v255, %v243
        %v257 = vadd.f32 %v256, %v245
        %v258 = vrot.slane %v257, 4
        %v259 = vadd.f32 %v257, %v258
        %v260 = vrot.slane %v259, 2
        %v261 = vadd.f32 %v259, %v260
        %v262 = vrot.slane %v261, 1
        %v263 = vadd.f32 %v261, %v262
        %v264 = vmul.f32 %v254, 0.03125
        %v265 = vmul.f32 %v263, 0.03125
        %v266 = vsub.f32 %v238, %v264
        %v267 = vsub.f32 %v239, %v265
        %v268 = vsub.f32 %v240, %v264
        %v269 = vsub.f32 %v241, %v265
        %v270 = vsub.f32 %v242, %v264
        %v271 = vsub.f32 %v243, %v265
        %v272 = vsub.f32 %v244, %v264
        %v273 = vsub.f32 %v245, %v265
        %v274 = vmul.f32 %v266, %v266
        %v275 = vmul.f32 %v267, %v267
        %v276 = vmul.f32 %v268, %v268
        %v277 = vmul.f32 %v269, %v269
        %v278 = vmul.f32 %v270, %v270
        %v279 = vmul.f32 %v271, %v271
        %v280 = vmul.f32 %v272, %v272
        %v281 = vmul.f32 %v273, %v273
        %v282 = vadd.f32 %v274, %v276
        %v283 = vadd.f32 %v282, %v278
        %v284 = vadd.f32 %v283, %v280
        %v285 = vrot.slane %v284, 4
        %v286 = vadd.f32 %v284, %v285
        %v287 = vrot.slane %v286, 2
        %v288 = vadd.f32 %v286, %v287
        %v289 = vrot.slane %v288, 1
        %v290 = vadd.f32 %v288, %v289
        %v291 = vadd.f32 %v275, %v277
        %v292 = vadd.f32 %v291, %v279
        %v293 = vadd.f32 %v292, %v281
        %v294 = vrot.slane %v293, 4
        %v295 = vadd.f32 %v293, %v294
        %v296 = vrot.slane %v295, 2
        %v297 = vadd.f32 %v295, %v296
        %v298 = vrot.slane %v297, 1
        %v299 = vadd.f32 %v297, %v298
        %v300 = vmul.f32 %v290, 0.03125
        %v301 = vmul.f32 %v299, 0.03125
        %v302 = vadd.f32 %v300, 1e-06
        %v303 = vadd.f32 %v301, 1e-06
        %v304 = vrsqrt.pop %v302
        %v305 = vrsqrt.pop %v303
        %v306 = vld [vmem:[#allocation5] sm:$0xff]
        %v307 = vld [vmem:[#allocation5 + $0x8] sm:$0xff]
        %v308 = vld [vmem:[#allocation5 + $0x10] sm:$0xff]
        %v309 = vld [vmem:[#allocation5 + $0x18] sm:$0xff]
        %v310 = vld [vmem:[#allocation7] sm:$0xff]
        %v311 = vld [vmem:[#allocation7 + $0x8] sm:$0xff]
        %v312 = vld [vmem:[#allocation7 + $0x10] sm:$0xff]
        %v313 = vld [vmem:[#allocation7 + $0x18] sm:$0xff]
        %315 = vset.pattern.permute.xlu0 0
        %316 = vperm.xlu0 %315, %v306
        %v317 = vpop.permute.xlu0 %316
        %320 = vset.pattern.permute.xlu0 0
        %321 = vperm.xlu0 %320, %v307
        %v322 = vpop.permute.xlu0 %321
        %325 = vset.pattern.permute.xlu0 0
        %326 = vperm.xlu0 %325, %v308
        %v327 = vpop.permute.xlu0 %326
        %330 = vset.pattern.permute.xlu0 0
        %331 = vperm.xlu0 %330, %v309
        %v332 = vpop.permute.xlu0 %331
        %v334 = vmul.f32 %v304, %v317
        %v335 = vmul.f32 %v305, %v317
        %v336 = vmul.f32 %v304, %v322
        %v337 = vmul.f32 %v305, %v322
        %v338 = vmul.f32 %v304, %v327
        %v339 = vmul.f32 %v305, %v327
        %v340 = vmul.f32 %v304, %v332
        %v341 = vmul.f32 %v305, %v332
        %v342 = vmul.f32 %v266, %v334
        %v343 = vmul.f32 %v267, %v335
        %v344 = vmul.f32 %v268, %v336
        %v345 = vmul.f32 %v269, %v337
        %v346 = vmul.f32 %v270, %v338
        %v347 = vmul.f32 %v271, %v339
        %v348 = vmul.f32 %v272, %v340
        %v349 = vmul.f32 %v273, %v341
        %351 = vset.pattern.permute.xlu0 0
        %352 = vperm.xlu0 %351, %v310
        %v353 = vpop.permute.xlu0 %352
        %356 = vset.pattern.permute.xlu0 0
        %357 = vperm.xlu0 %356, %v311
        %v358 = vpop.permute.xlu0 %357
        %361 = vset.pattern.permute.xlu0 0
        %362 = vperm.xlu0 %361, %v312
        %v363 = vpop.permute.xlu0 %362
        %366 = vset.pattern.permute.xlu0 0
        %367 = vperm.xlu0 %366, %v313
        %v368 = vpop.permute.xlu0 %367
        %v370 = vadd.f32 %v342, %v353
        %v371 = vadd.f32 %v343, %v353
        %v372 = vadd.f32 %v344, %v358
        %v373 = vadd.f32 %v345, %v358
        %v374 = vadd.f32 %v346, %v363
        %v375 = vadd.f32 %v347, %v363
        %v376 = vadd.f32 %v348, %v368
        %v377 = vadd.f32 %v349, %v368
        %378 = vst [vmem:[%s235] sm:$0xff] %v370
        %379 = vst [vmem:[%s235 + $0x8] sm:$0xff] %v371
        %380 = vst [vmem:[%s235 + $0x10] sm:$0xff] %v372
        %381 = vst [vmem:[%s235 + $0x18] sm:$0xff] %v373
        %382 = vst [vmem:[%s235 + $0x20] sm:$0xff] %v374
        %383 = vst [vmem:[%s235 + $0x28] sm:$0xff] %v375
        %384 = vst [vmem:[%s235 + $0x30] sm:$0xff] %v376
        %385 = vst [vmem:[%s235 + $0x38] sm:$0xff] %v377
        %s386 = sand.u32 %s113, 1
        %s387 = scalar_lea.sflag [#allocation4], %s386
        %s388 = sand.u32 %s113, 1
        %s389 = smul.addr %s388, 64
        %s390 = scalar_lea.vmem [#allocation8], %s389
        // Predicated region
        $region45: #{tpu_custom_call.1} parent=31 // pred_check
          %p391 = pneg %p123
        $region46: #{tpu_custom_call.1} parent=31 // pred_check_branch
          %393 = sbr.rel (%p391) target = $region48
        $region47: #{tpu_custom_call.1} parent=31 // pred_region
          %s394 = smul.u32 2, %s26
          %s396 = ssub.s32 1024, 1024
          %397 = vsyncadd %s387, %s396
          %s398 = smul.addr %s25, 8
          %s399 = sadd.s32 %s394, %s398
          %s400 = smul.addr %s399, 128
          %s401 = scalar_lea.hbm %s3, %s400
          %s402 = sshll.u32 %s390, 4
          %s403 = int_to_ptr.vmem [resolvable:$true] %s402
          %408 = dma.vmem_to_hbm [thread:$0]  %s403, 1024, %s401, %s387, 256, 256, 16
        $region48: #{tpu_custom_call.1} parent=31 // pred_fallthru
          _
      $region32: #{tpu_custom_call.1} parent=5 // pred_fallthru
        _
      %p409 = scmp.le.s32.totalorder 2, %s16
      // Predicated region
      $region49: #{tpu_custom_call.1} parent=5 // pred_check
        %p410 = pneg %p409
      $region50: #{tpu_custom_call.1} parent=5 // pred_check_branch
        %412 = sbr.rel (%p410) target = $region52
      $region51: #{tpu_custom_call.1} parent=5 // pred_region
        %s413 = ssub.s32 %s16, 2
        // Predicated region
        $region53: #{tpu_custom_call.1} parent=51 // pred_check
          %p414 = pneg %p129
        $region54: #{tpu_custom_call.1} parent=51 // pred_check_branch
          %416 = sbr.rel (%p414) target = $region56
        $region55: #{tpu_custom_call.1} parent=51 // pred_region
          %s417 = sand.u32 %s114, 1
          %s418 = scalar_lea.sflag [#allocation4], %s417
          %s419 = sand.u32 %s114, 1
          %s420 = smul.addr %s419, 64
          %s421 = scalar_lea.vmem [#allocation8], %s420
          %422 = dma.done %s418, 1024
        $region56: #{tpu_custom_call.1} parent=51 // pred_fallthru
          _
      $region52: #{tpu_custom_call.1} parent=5 // pred_fallthru
        _
    $region6: #{tpu_custom_call.1} parent=1 // loop_footer
      %s20 = sadd.s32 1, %s16
    $region7: #{tpu_custom_call.1} parent=1 // loop_footer_branch
      %15 = sbr.rel target = $region3
    $region8: #{tpu_custom_call.1} parent=1 // loop_exit
      _
    %423 = vsyncpa [#allocation3], 1
    %s424 = scalar_lea.sflag [#allocation3], 1
    %425 = vsyncpa %s424, 1
    %426 = vsyncpa [#allocation6], 1
    %427 = vsyncpa [#allocation4], 1
    %s428 = scalar_lea.sflag [#allocation4], 1
    %429 = vsyncpa %s428, 1

</llo_original>
